<compile_context>
chip_gen: v7x
topology: tpu7x:2x2x1
jax: 0.10.0
libtpu: 0.0.40
codegen_flags: <defaults>
</compile_context>

<pallas_src>
import functools

import jax
import jax.numpy as jnp
from jax import lax
from jax.experimental import pallas as pl
from jax.experimental.pallas import tpu as pltpu

_MIB = 1024 * 1024


def _round_up(n, m):
    return ((n + m - 1) // m) * m


def _vmem_limit(estimate_bytes):
    # ~2x headroom over the computed working set; never below the 32 MiB scoped
    # default, never above v7x's 64 MiB physical VMEM.
    return int(min(max(2 * estimate_bytes, 32 * _MIB), 64 * _MIB))


def _const_spec(block_shape, index_map):
    """BlockSpec for a constant-index (weight/bias) operand.

    Single-buffered: the index_map never changes, so default double-buffering
    would just duplicate the weights in VMEM (e.g. an extra 32 MiB for a
    H=2048 f32 W_hh^T), which by itself blows v7x's 64 MiB budget.
    """
    if hasattr(pl, "Buffered"):
        try:
            return pl.BlockSpec(block_shape, index_map, pipeline_mode=pl.Buffered(1))
        except TypeError:  # older jax without pipeline_mode support
            pass
    return pl.BlockSpec(block_shape, index_map)


def _pick_tile(dim, candidates):
    for cand in candidates:
        if dim > cand and dim % cand == 0:
            return cand
    return dim


def _batch_block(b, max_block=256):
    # On single-TensorCore chips one full batch block (up to the MXU row width)
    # keeps the recurrent (bb, H) @ (H, 4H) matmul's row utilization high and
    # minimizes grid-step overhead; only split when B is large.
    if b <= max_block:
        return b
    for cand in (256, 128, 64, 32, 16, 8):
        if b % cand == 0:
            return cand
    return b


# ---------------------------------------------------------------------------
# Dense projection kernel:  y = (tanh(x) if apply_tanh else x) @ w + b
# Used for the hoisted input projection and the hoisted tanh+Linear epilogue.
# ---------------------------------------------------------------------------
def _dense_kernel(x_ref, w_ref, b_ref, o_ref, *, apply_tanh):
    x = x_ref[...]
    if apply_tanh:
        x = jnp.tanh(x)
    acc = jnp.dot(x, w_ref[...], preferred_element_type=jnp.float32)
    o_ref[...] = (acc + b_ref[...]).astype(o_ref.dtype)


def _dense(x2d, w, b, *, apply_tanh=False, out_dtype=jnp.float32):
    """Tiled (M, N) dense matmul.  `w` is (K, N), `b` is (1, N) float32."""
    m, k = x2d.shape
    n = w.shape[1]
    tm = _pick_tile(m, (512, 256, 128))
    tn = _pick_tile(n, (2048, 1024, 512))  # N tiling so large 4H compiles on v7x
    # TODO(synk): add K tiling with an f32 VMEM accumulator for very large K.

    est = (2 * tm * k * jnp.dtype(x2d.dtype).itemsize        # x blocks
           + k * tn * jnp.dtype(w.dtype).itemsize            # weight block
           + tn * 4                                          # bias block
           + 2 * tm * tn * jnp.dtype(out_dtype).itemsize)    # output blocks

    # Only single-buffer the weight/bias when their block index truly never
    # changes (i.e. no N tiling); otherwise keep default double-buffering.
    make_w_spec = _const_spec if (n // tn) == 1 else pl.BlockSpec

    kernel = functools.partial(_dense_kernel, apply_tanh=apply_tanh)
    return pl.pallas_call(
        kernel,
        out_shape=jax.ShapeDtypeStruct((m, n), out_dtype),
        grid=(m // tm, n // tn),
        in_specs=[
            pl.BlockSpec((tm, k), lambda i, j: (i, 0)),
            make_w_spec((k, tn), lambda i, j: (0, j)),
            make_w_spec((1, tn), lambda i, j: (0, j)),
        ],
        out_specs=pl.BlockSpec((tm, tn), lambda i, j: (i, j)),
        compiler_params=pltpu.CompilerParams(
            dimension_semantics=("parallel", "parallel"),
            vmem_limit_bytes=_vmem_limit(est)),
    )(x2d, w, b)


# ---------------------------------------------------------------------------
# Recurrent kernel: one grid step = one (batch_block, time_block) tile.
# ---------------------------------------------------------------------------
def _lstm_recurrence_kernel(gx_ref, whh_ref, h_out_ref, h_sc, c_sc, *, unroll):
    # Re-initialize the carried h/c state at the first time block of every
    # batch block (time is the inner grid axis).
    @pl.when(pl.program_id(1) == 0)
    def _():
        h_sc[...] = jnp.zeros_like(h_sc)
        c_sc[...] = jnp.zeros_like(c_sc)

    hidden = h_sc.shape[1]
    tt = gx_ref.shape[0]
    w_dtype = whh_ref.dtype

    def step(t, carry):
        # gates_x[t] (= x_t @ W_ih^T + bias) was hoisted out of the recurrence;
        # only the recurrent matmul + gate math stay on the serial path.
        gates = (gx_ref[t].astype(jnp.float32)
                 + jnp.dot(h_sc[...].astype(w_dtype), whh_ref[...],
                           preferred_element_type=jnp.float32))
        # Gate layout (permuted at weight-prep time) is [i, f, o, g]:
        # ONE contiguous sigmoid pass over 3H lanes + ONE tanh pass over H.
        sig = jax.nn.sigmoid(gates[:, :3 * hidden])
        i_g = sig[:, 0 * hidden:1 * hidden]
        f_g = sig[:, 1 * hidden:2 * hidden]
        o_g = sig[:, 2 * hidden:3 * hidden]
        g_g = jnp.tanh(gates[:, 3 * hidden:])

        c_t = f_g * c_sc[...] + i_g * g_g
        h_t = o_g * jnp.tanh(c_t)
        c_sc[...] = c_t
        h_sc[...] = h_t
        h_out_ref[t] = h_t.astype(h_out_ref.dtype)
        return carry

    # Partial unroll keeps LLO scheduling visibility without blowing
    # instruction memory / vreg live ranges at realistic bb*4H sizes.
    lax.fori_loop(0, tt, step, 0, unroll=unroll)


# ---------------------------------------------------------------------------
# Forward pass
# ---------------------------------------------------------------------------
def lstm_forward(x, params, *, time_block=32, batch_block=None,
                 matmul_dtype=jnp.bfloat16):
    """x: (T, B, I) float32 -> (T, B, O) float32 (matches the PyTorch module).

    matmul_dtype controls all MXU operands (x, gates_x, h, weights): bf16 by
    default (~4x MXU throughput on v6e/v7x, halves VMEM/HBM for the weights and
    the (T,B,4H)/(T,B,H) intermediates).  Accumulation, bias adds, activations
    and the recurrent h/c state stay in float32.
    """
    T, B, I = x.shape
    H = params["w_hh"].shape[1]          # w_hh: (4H, H)
    O = params["w_lin"].shape[0]         # w_lin: (O, H)

    # --- weight prep (runs once, outside the kernels) ----------------------
    # Permute PyTorch gate order [i, f, g, o] -> [i, f, o, g] so the kernel can
    # run one sigmoid over [:, :3H] and one tanh over [:, 3H:4H].
    perm = jnp.concatenate([
        jnp.arange(0, H), jnp.arange(H, 2 * H),              # i, f
        jnp.arange(3 * H, 4 * H), jnp.arange(2 * H, 3 * H),  # o, g
    ])
    wih_t = params["w_ih"][perm].T.astype(matmul_dtype)                 # (I, 4H)
    whh_t = params["w_hh"][perm].T.astype(matmul_dtype)                 # (H, 4H)
    b_gate = (params["b_ih"] + params["b_hh"])[perm]
    b_gate = b_gate.reshape(1, 4 * H).astype(jnp.float32)

    # Lane-dense epilogue output: pad O up to a multiple of 128 so the store is
    # an unmasked vst; the wrapper slices the padding away afterwards.
    O_pad = _round_up(O, 128)
    wlin_t = params["w_lin"].T.astype(jnp.float32)                      # (H, O)
    blin = params["b_lin"].astype(jnp.float32)
    if O_pad != O:
        wlin_t = jnp.pad(wlin_t, ((0, 0), (0, O_pad - O)))
        blin = jnp.pad(blin, (0, O_pad - O))
    wlin_t = wlin_t.astype(matmul_dtype)
    blin = blin.reshape(1, O_pad)

    # (1) Hoisted input projection: one big matmul with M = T*B.
    # TODO(synk): fuse this projection into the recurrence kernel (per-block
    # (tt*bb, I) @ W_ih^T into VMEM scratch) to remove the (T, B, 4H) HBM round
    # trip on bandwidth-bound v5e/v6e.
    gates_x = _dense(x.reshape(T * B, I).astype(matmul_dtype), wih_t, b_gate,
                     out_dtype=matmul_dtype)
    gates_x = gates_x.reshape(T, B, 4 * H)

    # (2) Recurrence over (batch_block, time_block) tiles.  Pad T to a multiple
    # of the time block; padded steps only produce trailing h's that are sliced
    # away (the carried state after the last real step is never consumed).
    tt = min(T, time_block)
    Tp = _round_up(T, tt)
    if Tp != T:
        gates_x = jnp.pad(gates_x, ((0, Tp - T), (0, 0), (0, 0)))
    bb = batch_block if batch_block is not None else _batch_block(B)

    gsize = jnp.dtype(matmul_dtype).itemsize
    est = (2 * tt * bb * 4 * H * gsize        # gates_x blocks (double buffered)
           + H * 4 * H * gsize                # W_hh^T (single buffered)
           + 2 * tt * bb * H * gsize          # h_out blocks
           + 2 * bb * H * 4)                  # f32 h/c scratch

    kernel = functools.partial(_lstm_recurrence_kernel, unroll=min(tt, 8))
    grid_spec = pltpu.PrefetchScalarGridSpec(
        num_scalar_prefetch=0,
        grid=(B // bb, Tp // tt),
        in_specs=[
            pl.BlockSpec((tt, bb, 4 * H), lambda bi, ti: (ti, bi, 0)),  # gates_x
            _const_spec((H, 4 * H), lambda bi, ti: (0, 0)),             # W_hh^T
        ],
        out_specs=pl.BlockSpec((tt, bb, H), lambda bi, ti: (ti, bi, 0)),
        scratch_shapes=[
            pltpu.VMEM((bb, H), jnp.float32),    # h state (f32, persists over time)
            pltpu.VMEM((bb, H), jnp.float32),    # c state
        ],
    )

    h_all = pl.pallas_call(
        kernel,
        out_shape=jax.ShapeDtypeStruct((Tp, B, H), matmul_dtype),
        grid_spec=grid_spec,
        compiler_params=pltpu.CompilerParams(
            # batch blocks are independent -> "parallel"; time carries state ->
            # "arbitrary" (sequential).
            # TODO(synk): on v7x use pltpu.CORE_PARALLEL on the batch axis with
            # bb = B // 2 once B is large enough to split across the 2 TCs.
            dimension_semantics=("parallel", "arbitrary"),
            vmem_limit_bytes=_vmem_limit(est)),
    )(gates_x, whh_t)

    h_all = h_all[:T]

    # (3) Hoisted epilogue: tanh + Linear as one big matmul, lane-padded N.
    out = _dense(h_all.reshape(T * B, H), wlin_t, blin,
                 apply_tanh=True, out_dtype=jnp.float32)
    return out[:, :O].reshape(T, B, O)


# ---------------------------------------------------------------------------
# Pure-JAX reference matching PyTorch nn.LSTM -> tanh -> Linear
# ---------------------------------------------------------------------------
def lstm_reference(x, params):
    H = params["w_hh"].shape[1]
    B = x.shape[1]

    def step(carry, x_t):
        h, c = carry
        gates = (x_t @ params["w_ih"].T + params["b_ih"]
                 + h @ params["w_hh"].T + params["b_hh"])
        i = jax.nn.sigmoid(gates[:, 0 * H:1 * H])
        f = jax.nn.sigmoid(gates[:, 1 * H:2 * H])
        g = jnp.tanh(gates[:, 2 * H:3 * H])
        o = jax.nn.sigmoid(gates[:, 3 * H:4 * H])
        c = f * c + i * g
        h = o * jnp.tanh(c)
        return (h, c), h

    h0 = jnp.zeros((B, H), jnp.float32)
    c0 = jnp.zeros((B, H), jnp.float32)
    _, hs = jax.lax.scan(step, (h0, c0), x)
    out = jnp.tanh(hs)
    return out @ params["w_lin"].T + params["b_lin"]


def init_params(key, input_size, hidden_size, output_size):
    ks = jax.random.split(key, 6)
    k_lstm = 1.0 / jnp.sqrt(hidden_size)
    k_lin = 1.0 / jnp.sqrt(hidden_size)
    u = lambda k, shape, s: jax.random.uniform(k, shape, jnp.float32, -s, s)
    return {
        "w_ih": u(ks[0], (4 * hidden_size, input_size), k_lstm),
        "w_hh": u(ks[1], (4 * hidden_size, hidden_size), k_lstm),
        "b_ih": u(ks[2], (4 * hidden_size,), k_lstm),
        "b_hh": u(ks[3], (4 * hidden_size,), k_lstm),
        "w_lin": u(ks[4], (output_size, hidden_size), k_lin),
        "b_lin": u(ks[5], (output_size,), k_lin),
    }


if __name__ == "__main__":
    SEQ, BATCH, INPUT, HIDDEN, OUTPUT = 8, 2, 4, 32, 8

    key = jax.random.PRNGKey(0)
    k_x, k_p = jax.random.split(key)
    x = jax.random.normal(k_x, (SEQ, BATCH, INPUT), jnp.float32)
    params = init_params(k_p, INPUT, HIDDEN, OUTPUT)

    ref = lstm_reference(x, params)

    # f32 matmul-operand path: tight check (verifies the gate reorder etc.).
    out_f32 = jax.block_until_ready(
        lstm_forward(x, params, matmul_dtype=jnp.float32))
    assert out_f32.shape == (SEQ, BATCH, OUTPUT)
    assert jnp.allclose(out_f32, ref, atol=2e-5, rtol=2e-5), (
        f"f32 max abs err {jnp.max(jnp.abs(out_f32 - ref))}")

    # Default bf16 matmul-operand path (production config): loose check.
    out_bf16 = jax.block_until_ready(lstm_forward(x, params))
    assert out_bf16.shape == (SEQ, BATCH, OUTPUT)
    assert jnp.allclose(out_bf16, ref, atol=5e-2, rtol=5e-2), (
        f"bf16 max abs err {jnp.max(jnp.abs(out_bf16 - ref))}")

    print("KERNEL_OK")
</pallas_src>

<mosaic_0001>
module attributes {stable_mosaic.version = 11 : i64} {
  func.func @_dense_kernel(%arg0: i32, %arg1: i32, %arg2: memref<16x4xf32, #tpu.memory_space<vmem>>, %arg3: memref<4x128xf32, #tpu.memory_space<vmem>>, %arg4: memref<1x128xf32, #tpu.memory_space<vmem>>, %arg5: memref<16x128xf32, #tpu.memory_space<vmem>>) attributes {dimension_semantics = [#tpu.dimension_semantics<parallel>, #tpu.dimension_semantics<parallel>], iteration_bounds = array<i64: 1, 1>, scalar_prefetch = 0 : i64, scratch_operands = 0 : i64, tpu.core_type = #tpu.core_type<tc>, window_params = [{transform_indices = @transform_0, window_bounds = array<i64: 16, 4>}, {pipeline_mode = #tpu.pipeline_mode<synchronous>, transform_indices = @transform_1, window_bounds = array<i64: 4, 128>}, {pipeline_mode = #tpu.pipeline_mode<synchronous>, transform_indices = @transform_2, window_bounds = array<i64: 1, 128>}, {transform_indices = @transform_3, window_bounds = array<i64: 16, 128>}]} {
    %c0 = arith.constant 0 : index
    %c0_0 = arith.constant 0 : index
    %0 = vector.load %arg2[%c0, %c0_0] : memref<16x4xf32, #tpu.memory_space<vmem>>, vector<16x4xf32>
    %c0_1 = arith.constant 0 : index
    %c0_2 = arith.constant 0 : index
    %1 = vector.load %arg3[%c0_1, %c0_2] : memref<4x128xf32, #tpu.memory_space<vmem>>, vector<4x128xf32>
    %cst = arith.constant dense<0.000000e+00> : vector<16x128xf32>
    %2 = tpu.matmul %0, %1, %cst {dimension_numbers = #tpu.dot_dimension_numbers<[1], [0], [0], [1], [0, 0, 1, 1], [], []>} : vector<16x4xf32>, vector<4x128xf32>, vector<16x128xf32> -> vector<16x128xf32>
    %c0_3 = arith.constant 0 : index
    %c0_4 = arith.constant 0 : index
    %3 = vector.load %arg4[%c0_3, %c0_4] : memref<1x128xf32, #tpu.memory_space<vmem>>, vector<1x128xf32>
    %4 = vector.broadcast %3 : vector<1x128xf32> to vector<16x128xf32>
    %5 = arith.addf %2, %4 : vector<16x128xf32>
    %c0_5 = arith.constant 0 : index
    %c0_6 = arith.constant 0 : index
    %6 = vector.load %arg5[%c0_5, %c0_6] : memref<16x128xf32, #tpu.memory_space<vmem>>, vector<16x128xf32>
    tpu.vector_store %arg5[%c0_5, %c0_6], %5 {strides = array<i32>} : memref<16x128xf32, #tpu.memory_space<vmem>>, vector<16x128xf32>,
    return
  }
  func.func @transform_0(%arg0: i32, %arg1: i32) -> (i32, i32) {
    %c0_i32 = arith.constant 0 : i32
    %c0_i32_0 = arith.constant 0 : i32
    return %arg0, %c0_i32 : i32, i32
  }
  func.func @transform_1(%arg0: i32, %arg1: i32) -> (i32, i32) {
    %c0_i32 = arith.constant 0 : i32
    %c0_i32_0 = arith.constant 0 : i32
    return %c0_i32, %arg1 : i32, i32
  }
  func.func @transform_2(%arg0: i32, %arg1: i32) -> (i32, i32) {
    %c0_i32 = arith.constant 0 : i32
    %c0_i32_0 = arith.constant 0 : i32
    return %c0_i32, %arg1 : i32, i32
  }
  func.func @transform_3(%arg0: i32, %arg1: i32) -> (i32, i32) {
    %c0_i32 = arith.constant 0 : i32
    return %arg0, %arg1 : i32, i32
  }
}

</mosaic_0001>

<llo_original>
// kernel: tpu_custom_call.1
$region0: #{tpu_custom_call.1}
  #allocation0 [shape = 'u32[]', space=smem, size = 0x4, offset = 0x4, fixed_abs, tag = 'smem constant byte address 0x4 - core index']
  #allocation1 [shape = 'u32[144,128]{1,0:T(1,128)}', space=vmem, size = 0x12000, scoped, tag = 'internal scratch']
  %s0 = inlined_call_operand.vmem [shape: f32[16,4], index: 0, kind: input, shape index: {}]
  %s1 = inlined_call_operand.vmem [shape: f32[4,128], index: 1, kind: input, shape index: {}]
  %s2 = inlined_call_operand.vmem [shape: f32[1,128], index: 2, kind: input, shape index: {}]
  %s3 = inlined_call_operand.hbm [shape: f32[16,128], index: 3, kind: output, shape index: {}]
  %s4 = sld [smem:[#allocation0]]
  $region22: #{tpu_custom_call.1} parent=0
    _
  %s6 = ssub.s32 1, %s4
  %s7 = scalar_select 0, %s6, %s4
  $region1: #{tpu_custom_call.1} parent=0
    #allocation2 [shape = 'u8[8192]{0}', space=vmem, size = 0x2000, scoped, tag = 'output window, operand 0, single buffered']
    #allocation3 [shape = 's32[1]{0}', space=sflag, size = 0x4, scoped, tag = 'scoped memory for tpu_custom_call.1']
    %8 = vsyncpa [#allocation3], 0
    // Predicated region
    $region2: #{tpu_custom_call.1} parent=1 // pred_check
      _
    $region3: #{tpu_custom_call.1} parent=1 // pred_check_branch
      %10 = sbr.rel (0) target = $region5
    $region4: #{tpu_custom_call.1} parent=1 // pred_region
      _
    $region5: #{tpu_custom_call.1} parent=1 // pred_fallthru
      _
    // Predicated region
    $region6: #{tpu_custom_call.1} parent=1 // pred_check
      _
    $region7: #{tpu_custom_call.1} parent=1 // pred_check_branch
      %12 = sbr.rel (0) target = $region9
    $region8: #{tpu_custom_call.1} parent=1 // pred_region
      _
    $region9: #{tpu_custom_call.1} parent=1 // pred_fallthru
      _
    // Predicated region
    $region10: #{tpu_custom_call.1} parent=1 // pred_check
      _
    $region11: #{tpu_custom_call.1} parent=1 // pred_check_branch
      %14 = sbr.rel (0) target = $region13
    $region12: #{tpu_custom_call.1} parent=1 // pred_region
      _
    $region13: #{tpu_custom_call.1} parent=1 // pred_fallthru
      _
    %v15 = vld [vmem:[%s0] sm:$0xff]
    %v16 = vld [vmem:[%s0 + $0x8] sm:$0xff]
    %v17 = vld [vmem:[%s1] sm:$0xf]
    %v18 = vld [vmem:[%s2] sm:$0x1]
    %v20 = vlaneseq
    %v21 = vshrl.u32 %v20, 7
    %v22 = vsub.s32 0, %v21
    %v23 = vrot.slane %v18, %v22
    %vm25 = vcmask 31744
    %v27 = vsel %vm25, %v15, 0
    %v30 = vsel %vm25, %v16, 0
    %vm32 = vcmask 1043456
    %v34 = vsel %vm32, %v17, 0
    %36 = vmatprep.subr.mxu0 0.0
    %37 = vmatpush1.msra.mxu0 %v34
    %38 = vmatprep.subr.mxu0 0.0
    %39 = vmatpush1.msra.mxu0 0.0
    %40 = vmatprep.subr.mxu0 0.0
    %41 = vmatpush1.msra.mxu0 0.0
    %42 = vmatprep.subr.mxu0 0.0
    %43 = vmatpush1.msra.mxu0 0.0
    %44 = vmatprep.subr.mxu0 0.0
    %45 = vmatpush1.msra.mxu0 0.0
    %46 = vmatprep.subr.mxu0 0.0
    %47 = vmatpush1.msra.mxu0 0.0
    %48 = vmatprep.subr.mxu0 0.0
    %49 = vmatpush1.msra.mxu0 0.0
    %50 = vmatprep.subr.mxu0 0.0
    %51 = vmatpush1.msra.mxu0 0.0
    %52 = vmatprep.subr.mxu0 0.0
    %53 = vmatpush1.msra.mxu0 0.0
    %54 = vmatprep.subr.mxu0 0.0
    %55 = vmatpush1.msra.mxu0 0.0
    %56 = vmatprep.subr.mxu0 0.0
    %57 = vmatpush1.msra.mxu0 0.0
    %58 = vmatprep.subr.mxu0 0.0
    %59 = vmatpush1.msra.mxu0 0.0
    %60 = vmatprep.subr.mxu0 0.0
    %61 = vmatpush1.msra.mxu0 0.0
    %62 = vmatprep.subr.mxu0 0.0
    %63 = vmatpush1.msra.mxu0 0.0
    %64 = vmatprep.subr.mxu0 0.0
    %65 = vmatpush1.msra.mxu0 0.0
    %66 = vmatprep.subr.mxu0 0.0
    %67 = vmatpush1.msra.mxu0 0.0
    %68 = vmatprep.subr.mxu0 0.0
    %69 = vmatpush1.msra.mxu0 0.0
    %70 = vmatprep.subr.mxu0 0.0
    %71 = vmatpush1.msra.mxu0 0.0
    %72 = vmatprep.subr.mxu0 0.0
    %73 = vmatpush1.msra.mxu0 0.0
    %74 = vmatprep.subr.mxu0 0.0
    %75 = vmatpush1.msra.mxu0 0.0
    %76 = vmatprep.subr.mxu0 0.0
    %77 = vmatpush1.msra.mxu0 0.0
    %78 = vmatprep.subr.mxu0 0.0
    %79 = vmatpush1.msra.mxu0 0.0
    %80 = vmatprep.subr.mxu0 0.0
    %81 = vmatpush1.msra.mxu0 0.0
    %82 = vmatprep.subr.mxu0 0.0
    %83 = vmatpush1.msra.mxu0 0.0
    %84 = vmatprep.subr.mxu0 0.0
    %85 = vmatpush1.msra.mxu0 0.0
    %86 = vmatprep.subr.mxu0 0.0
    %87 = vmatpush1.msra.mxu0 0.0
    %88 = vmatprep.subr.mxu0 0.0
    %89 = vmatpush1.msra.mxu0 0.0
    %90 = vmatprep.subr.mxu0 0.0
    %91 = vmatpush1.msra.mxu0 0.0
    %92 = vmatprep.subr.mxu0 0.0
    %93 = vmatpush1.msra.mxu0 0.0
    %94 = vmatprep.subr.mxu0 0.0
    %95 = vmatpush1.msra.mxu0 0.0
    %96 = vmatprep.subr.mxu0 0.0
    %97 = vmatpush1.msra.mxu0 0.0
    %98 = vmatprep.subr.mxu0 0.0
    %99 = vmatpush1.msra.mxu0 0.0
    %100 = vmatprep.mubr.f32.mxu0 0.0
    %101 = vmatmul.mubr.f32.gmra.mrb[0].mxu0 %v27
    %v102 = vpop.f32.mrb[0].mxu0
    %v103 = vadd.f32 %v23, %v102
    %v104 = vpop.f32.mrb[0].mxu0
    %105 = vmatprep.mubr.f32.mxu0 0.0
    %106 = vmatmul.mubr.f32.gmra.mrb[0].mxu0 %v30
    %v107 = vpop.f32.mrb[0].mxu0
    %v108 = vadd.f32 %v23, %v107
    %v109 = vpop.f32.mrb[0].mxu0
    %110 = vdwg.mxu0
    %111 = vst [vmem:[#allocation2] sm:$0xff] %v103
    %112 = vst [vmem:[#allocation2 + $0x8] sm:$0xff] %v108
    // Predicated region
    $region14: #{tpu_custom_call.1} parent=1 // pred_check
      _
    $region15: #{tpu_custom_call.1} parent=1 // pred_check_branch
      %114 = sbr.rel (0) target = $region17
    $region16: #{tpu_custom_call.1} parent=1 // pred_region
      %s116 = ssub.s32 256, 256
      %117 = vsyncadd [#allocation3], %s116
      %s118 = sshll.u32 [#allocation2], 4
      %s119 = int_to_ptr.vmem [resolvable:$true] %s118
      %124 = dma.vmem_to_hbm [thread:$0]  %s119, 256, %s3, [#allocation3], 128, 128, 8
    $region17: #{tpu_custom_call.1} parent=1 // pred_fallthru
      _
    // Predicated region
    $region18: #{tpu_custom_call.1} parent=1 // pred_check
      _
    $region19: #{tpu_custom_call.1} parent=1 // pred_check_branch
      %126 = sbr.rel (0) target = $region21
    $region20: #{tpu_custom_call.1} parent=1 // pred_region
      %127 = dma.done [#allocation3], 256
    $region21: #{tpu_custom_call.1} parent=1 // pred_fallthru
      _
    %128 = vsyncpa [#allocation3], 1

</llo_original>
